<compile_context>
chip_gen: v7x
topology: tpu7x:2x2x1
jax: 0.10.0
libtpu: 0.0.40
codegen_flags: <defaults>
</compile_context>

<pallas_src>
import math

import jax
import jax.numpy as jnp
from jax.experimental import pallas as pl
from jax.experimental.pallas import tpu as pltpu

BF16 = jnp.bfloat16
F32 = jnp.float32


# ---------------------------------------------------------------------------
# Helpers
# ---------------------------------------------------------------------------

def _round_up(v, m):
    return (v + m - 1) // m * m


def _lcm(a, b):
    return a * b // math.gcd(a, b)


def _vmem_capacity_bytes():
    """Per-TensorCore VMEM capacity; conservative fallback if query fails."""
    try:
        return int(pltpu.get_tpu_info().vmem_capacity_bytes)
    except Exception:
        return 64 << 20  # v7x per-core VMEM; safe lower bound everywhere


# ---------------------------------------------------------------------------
# Kernels
# ---------------------------------------------------------------------------

def _xw_kernel(x_ref, w1_ref, h_ref):
    """h0 = x @ W1 (reassociated SGConv linear; bias applied after S^K)."""
    h_ref[...] = jnp.dot(
        x_ref[...], w1_ref[...], preferred_element_type=F32
    ).astype(h_ref.dtype)


def _make_prop_kernel(tk):
    """One propagation hop: out = S @ h.  S streamed (tm, tk); h VMEM-resident."""

    def kernel(s_ref, h_ref, out_ref, acc_ref):
        k = pl.program_id(1)

        @pl.when(k == 0)
        def _():
            acc_ref[...] = jnp.zeros_like(acc_ref)

        off = pl.multiple_of(k * tk, tk)
        acc_ref[...] += jnp.dot(
            s_ref[...], h_ref[pl.ds(off, tk), :], preferred_element_type=F32)

        @pl.when(k == pl.num_programs(1) - 1)
        def _():
            out_ref[...] = acc_ref[...].astype(out_ref.dtype)

    return kernel


def _make_head_kernel(tk):
    """Last hop fused with bias + ReLU + fc1 + log_softmax (lane-dense out)."""

    def kernel(s_ref, h_ref, b1_ref, w2_ref, b2_ref, out_ref, acc_ref):
        k = pl.program_id(1)

        @pl.when(k == 0)
        def _():
            acc_ref[...] = jnp.zeros_like(acc_ref)

        off = pl.multiple_of(k * tk, tk)
        acc_ref[...] += jnp.dot(
            s_ref[...], h_ref[pl.ds(off, tk), :], preferred_element_type=F32)

        @pl.when(k == pl.num_programs(1) - 1)
        def _():
            hidden = jnp.maximum(acc_ref[...] + b1_ref[...], 0.0)   # f32 VPU
            logits = jnp.dot(hidden.astype(w2_ref.dtype), w2_ref[...],
                             preferred_element_type=F32) + b2_ref[...]
            # Padded class lanes carry a -1e9 bias -> exp() underflows to 0,
            # so log_softmax over the lane-dense slab is exact for real lanes.
            m = jnp.max(logits, axis=-1, keepdims=True)
            z = logits - m
            lse = jnp.log(jnp.sum(jnp.exp(z), axis=-1, keepdims=True))
            out_ref[...] = (z - lse).astype(out_ref.dtype)

    return kernel


def _make_resident_kernel(K):
    """Whole network in one invocation: S read from HBM once, K hops unrolled.

    Single grid point -> single TensorCore; acceptable because this path is
    only selected for graphs small enough that the K-fold S-traffic saving
    dominates (the whole job is a handful of microseconds).
    """

    def kernel(s_ref, x_ref, w1_ref, b1_ref, w2_ref, b2_ref, out_ref):
        h = jnp.dot(x_ref[...], w1_ref[...], preferred_element_type=F32)
        for _ in range(K):                      # K is a static Python int
            h = jnp.dot(s_ref[...], h.astype(BF16), preferred_element_type=F32)
        hidden = jnp.maximum(h + b1_ref[...], 0.0)
        logits = jnp.dot(hidden.astype(BF16), w2_ref[...],
                         preferred_element_type=F32) + b2_ref[...]
        m = jnp.max(logits, axis=-1, keepdims=True)
        z = logits - m
        lse = jnp.log(jnp.sum(jnp.exp(z), axis=-1, keepdims=True))
        out_ref[...] = (z - lse).astype(out_ref.dtype)

    return kernel


# ---------------------------------------------------------------------------
# Wrapper
# ---------------------------------------------------------------------------

def _pad_inputs(s, x, w1, b1, w2, b2, n_pad, f_pad, h_pad, c_pad):
    N, f_in = x.shape
    nhid = w1.shape[1]
    n_class = w2.shape[1]
    s_p = jnp.zeros((n_pad, n_pad), BF16).at[:N, :N].set(s.astype(BF16))
    x_p = jnp.zeros((n_pad, f_pad), BF16).at[:N, :f_in].set(x.astype(BF16))
    w1_p = jnp.zeros((f_pad, h_pad), BF16).at[:f_in, :nhid].set(w1.astype(BF16))
    w2_p = jnp.zeros((h_pad, c_pad), BF16).at[:nhid, :n_class].set(w2.astype(BF16))
    b1_p = jnp.zeros((1, h_pad), F32).at[0, :nhid].set(b1.astype(F32))
    # Huge negative bias in padded class lanes keeps them out of the softmax.
    b2_p = jnp.full((1, c_pad), -1e9, F32).at[0, :n_class].set(b2.astype(F32))
    return s_p, x_p, w1_p, b1_p, w2_p, b2_p


def gfnn_forward(s, x, w1, b1, w2, b2, *, K, tm=256, tk=512,
                 force_streaming=False):
    """GFNN forward: log_softmax(relu((S^K x) @ W1 + b1) @ W2 + b2)."""
    assert K >= 1, "SGConv propagation depth K must be >= 1"
    N, f_in = x.shape
    nhid = w1.shape[1]
    n_class = w2.shape[1]

    f_pad = _round_up(f_in, 128)
    h_pad = _round_up(nhid, 128)   # NOTE: if nhid stays tiny (e.g. 32), 3/4 of
    c_pad = _round_up(n_class, 128)  # the hop FLOPs are on zero lanes; free
                                     # while HBM-bound, revisit if MXU-bound.

    vmem_cap = _vmem_capacity_bytes()

    # ---------------- resident path: S held in VMEM for all K hops ----------
    n_pad_res = _round_up(N, 128)
    resident_need = (
        n_pad_res * n_pad_res * 2            # S (bf16)
        + n_pad_res * f_pad * 2              # x (bf16)
        + n_pad_res * c_pad * 4              # out (f32)
        + 3 * n_pad_res * h_pad * 4          # f32 h intermediates (liveness slack)
        + f_pad * h_pad * 2 + h_pad * c_pad * 2 + (h_pad + c_pad) * 4)
    use_resident = (not force_streaming) and (
        resident_need <= int(0.55 * vmem_cap))

    if use_resident:
        n_pad = n_pad_res
        s_p, x_p, w1_p, b1_p, w2_p, b2_p = _pad_inputs(
            s, x, w1, b1, w2, b2, n_pad, f_pad, h_pad, c_pad)
        vmem_limit = int(min(0.8 * vmem_cap,
                             max(2 * resident_need, 16 << 20)))
        out_pad = pl.pallas_call(
            _make_resident_kernel(K),
            out_shape=jax.ShapeDtypeStruct((n_pad, c_pad), F32),
            compiler_params=pltpu.CompilerParams(vmem_limit_bytes=vmem_limit),
        )(s_p, x_p, w1_p, b1_p, w2_p, b2_p)
        return out_pad[:N, :n_class]

    # ---------------- streaming path: S tiled (tm, tk), h VMEM-resident -----
    n_min = _round_up(N, 128)
    tm = max(128, (min(tm, n_min) // 128) * 128)
    tk = max(128, (min(tk, n_min) // 128) * 128)
    if n_min // tm < 2 and tm > 128:
        tm = 128  # keep >= 2 row tiles so v7x's second TensorCore has work
    n_pad = _round_up(N, _lcm(tm, tk))
    n_row = n_pad // tm
    n_col = n_pad // tk

    s_p, x_p, w1_p, b1_p, w2_p, b2_p = _pad_inputs(
        s, x, w1, b1, w2, b2, n_pad, f_pad, h_pad, c_pad)

    # VMEM budget: double-buffered streams + resident h/weights + accumulator,
    # with headroom, clamped to 75% of this generation's per-core capacity.
    streamed = 2 * (tm * tk * 2                      # S tiles
                    + tm * max(h_pad, c_pad) * 4     # output tiles
                    + tm * f_pad * 2)                # x tiles (xw call)
    resident = (2 * n_pad * h_pad * 2                # resident h (2 bufs worst)
                + f_pad * h_pad * 2 + h_pad * c_pad * 2
                + (h_pad + c_pad) * 4 + tm * h_pad * 4)
    vmem_limit = int(min(max(int(1.5 * (streamed + resident)), 16 << 20),
                         int(0.75 * vmem_cap)))

    params_1d = pltpu.CompilerParams(
        dimension_semantics=("parallel",), vmem_limit_bytes=vmem_limit)
    params_2d = pltpu.CompilerParams(
        dimension_semantics=("parallel", "arbitrary"),
        vmem_limit_bytes=vmem_limit)

    # --- h0 = x @ W1 (NHID-wide; reassociated ahead of propagation) ---------
    h = pl.pallas_call(
        _xw_kernel,
        out_shape=jax.ShapeDtypeStruct((n_pad, h_pad), BF16),
        grid_spec=pltpu.PrefetchScalarGridSpec(
            num_scalar_prefetch=0,
            grid=(n_row,),
            in_specs=[pl.BlockSpec((tm, f_pad), lambda i: (i, 0)),
                      pl.BlockSpec((f_pad, h_pad), lambda i: (0, 0))],
            out_specs=pl.BlockSpec((tm, h_pad), lambda i: (i, 0)),
        ),
        compiler_params=params_1d,
    )(x_p, w1_p)

    s_spec = pl.BlockSpec((tm, tk), lambda i, k: (i, k))
    # Constant index_map -> h DMA'd once and held VMEM-resident for the call.
    h_spec = pl.BlockSpec((n_pad, h_pad), lambda i, k: (0, 0))

    # --- hops 1 .. K-1: h <- S @ h (rows parallel, contraction arbitrary) ---
    prop = pl.pallas_call(
        _make_prop_kernel(tk),
        out_shape=jax.ShapeDtypeStruct((n_pad, h_pad), BF16),
        grid_spec=pltpu.PrefetchScalarGridSpec(
            num_scalar_prefetch=0,
            grid=(n_row, n_col),
            in_specs=[s_spec, h_spec],
            out_specs=pl.BlockSpec((tm, h_pad), lambda i, k: (i, 0)),
            scratch_shapes=[pltpu.VMEM((tm, h_pad), F32)],
        ),
        compiler_params=params_2d,
    )
    for _ in range(K - 1):
        h = prop(s_p, h)

    # --- last hop + bias + ReLU + fc1 + log_softmax (lane-dense output) -----
    out_pad = pl.pallas_call(
        _make_head_kernel(tk),
        out_shape=jax.ShapeDtypeStruct((n_pad, c_pad), F32),
        grid_spec=pltpu.PrefetchScalarGridSpec(
            num_scalar_prefetch=0,
            grid=(n_row, n_col),
            in_specs=[s_spec, h_spec,
                      pl.BlockSpec((1, h_pad), lambda i, k: (0, 0)),
                      pl.BlockSpec((h_pad, c_pad), lambda i, k: (0, 0)),
                      pl.BlockSpec((1, c_pad), lambda i, k: (0, 0))],
            out_specs=pl.BlockSpec((tm, c_pad), lambda i, k: (i, 0)),
            scratch_shapes=[pltpu.VMEM((tm, h_pad), F32)],
        ),
        compiler_params=params_2d,
    )(s_p, h, b1_p, w2_p, b2_p)

    return out_pad[:N, :n_class]


# ---------------------------------------------------------------------------
# Glue + reference
# ---------------------------------------------------------------------------

def build_normalized_adjacency(edge_index, num_nodes):
    """Dense S = D^{-1/2} (A + I) D^{-1/2} from an edge_index (2, E) array."""
    src, dst = edge_index[0], edge_index[1]
    a = jnp.zeros((num_nodes, num_nodes), F32)
    a = a.at[src, dst].set(1.0)
    a = a + jnp.eye(num_nodes, dtype=F32)          # add self loops
    deg = a.sum(axis=1)
    d_inv_sqrt = jnp.where(deg > 0, 1.0 / jnp.sqrt(deg), 0.0)
    return d_inv_sqrt[:, None] * a * d_inv_sqrt[None, :]


def reference_forward(s, x, w1, b1, w2, b2, *, K):
    """Pure-JAX reference with the same bf16-MXU / f32-accumulate numerics."""
    h = jnp.dot(x.astype(BF16), w1.astype(BF16), preferred_element_type=F32)
    for _ in range(K):
        h = jnp.dot(s.astype(BF16), h.astype(BF16), preferred_element_type=F32)
    h = jnp.maximum(h + b1, 0.0)
    logits = jnp.dot(h.astype(BF16), w2.astype(BF16),
                     preferred_element_type=F32) + b2
    return jax.nn.log_softmax(logits, axis=1)


if __name__ == "__main__":
    # Small deterministic problem: 16 nodes on a ring graph, 8 input features,
    # nhid=32, 4 classes, K=2 propagation hops.
    N, F_IN, NHID, NCLASS, K = 16, 8, 32, 4, 2

    key = jax.random.PRNGKey(0)
    k_x, k_w1, k_b1, k_w2, k_b2 = jax.random.split(key, 5)

    x = jax.random.normal(k_x, (N, F_IN), F32)                 # data.x

    idx = jnp.arange(N)                                        # ring graph
    edge_index = jnp.stack([
        jnp.concatenate([idx, (idx + 1) % N]),
        jnp.concatenate([(idx + 1) % N, idx]),
    ])                                                         # (2, 2N)

    # gc1 = SGConv(F_IN, NHID, K) -> W1 (F_IN, NHID), b1 (NHID,)
    # fc1 = Linear(NHID, NCLASS)  -> W2 (NHID, NCLASS), b2 (NCLASS,)
    w1 = jax.random.normal(k_w1, (F_IN, NHID), F32) / jnp.sqrt(F_IN)
    b1 = jax.random.normal(k_b1, (NHID,), F32) * 0.01
    w2 = jax.random.normal(k_w2, (NHID, NCLASS), F32) / jnp.sqrt(NHID)
    b2 = jax.random.normal(k_b2, (NCLASS,), F32) * 0.01

    s = build_normalized_adjacency(edge_index, N)
    ref = reference_forward(s, x, w1, b1, w2, b2, K=K)

    # Resident path (auto-selected at this size: S held in VMEM, one call).
    out_res = jax.block_until_ready(gfnn_forward(s, x, w1, b1, w2, b2, K=K))
    # Streaming path (exercised explicitly so both variants are validated).
    out_str = jax.block_until_ready(
        gfnn_forward(s, x, w1, b1, w2, b2, K=K, force_streaming=True))

    assert out_res.shape == (N, NCLASS)
    assert out_str.shape == (N, NCLASS)
    # bf16 MXU inputs (f32 accumulation) -> loosened tolerance vs f32-only.
    assert jnp.allclose(out_res, ref, atol=2e-2, rtol=2e-2), "resident mismatch"
    assert jnp.allclose(out_str, ref, atol=2e-2, rtol=2e-2), "streaming mismatch"

    print("KERNEL_OK")
</pallas_src>

<mosaic_0001>
module attributes {stable_mosaic.version = 11 : i64} {
  func.func @kernel(%arg0: memref<128x128xbf16, #tpu.memory_space<vmem>>, %arg1: memref<128x128xbf16, #tpu.memory_space<vmem>>, %arg2: memref<128x128xbf16, #tpu.memory_space<vmem>>, %arg3: memref<1x128xf32, #tpu.memory_space<vmem>>, %arg4: memref<128x128xbf16, #tpu.memory_space<vmem>>, %arg5: memref<1x128xf32, #tpu.memory_space<vmem>>, %arg6: memref<128x128xf32, #tpu.memory_space<vmem>>) attributes {dimension_semantics = [], scalar_prefetch = 0 : i64, scratch_operands = 0 : i64, tpu.core_type = #tpu.core_type<tc>} {
    %c0 = arith.constant 0 : index
    %c0_0 = arith.constant 0 : index
    %0 = vector.load %arg1[%c0, %c0_0] : memref<128x128xbf16, #tpu.memory_space<vmem>>, vector<128x128xbf16>
    %c0_1 = arith.constant 0 : index
    %c0_2 = arith.constant 0 : index
    %1 = vector.load %arg2[%c0_1, %c0_2] : memref<128x128xbf16, #tpu.memory_space<vmem>>, vector<128x128xbf16>
    %cst = arith.constant dense<0.000000e+00> : vector<128x128xf32>
    %2 = tpu.matmul %0, %1, %cst {dimension_numbers = #tpu.dot_dimension_numbers<[1], [0], [0], [1], [0, 0, 1, 1], [], []>} : vector<128x128xbf16>, vector<128x128xbf16>, vector<128x128xf32> -> vector<128x128xf32>
    %c0_3 = arith.constant 0 : index
    %c0_4 = arith.constant 0 : index
    %3 = vector.load %arg0[%c0_3, %c0_4] : memref<128x128xbf16, #tpu.memory_space<vmem>>, vector<128x128xbf16>
    %4 = arith.truncf %2 : vector<128x128xf32> to vector<128x128xbf16>
    %cst_5 = arith.constant dense<0.000000e+00> : vector<128x128xf32>
    %5 = tpu.matmul %3, %4, %cst_5 {dimension_numbers = #tpu.dot_dimension_numbers<[1], [0], [0], [1], [0, 0, 1, 1], [], []>} : vector<128x128xbf16>, vector<128x128xbf16>, vector<128x128xf32> -> vector<128x128xf32>
    %c0_6 = arith.constant 0 : index
    %c0_7 = arith.constant 0 : index
    %6 = vector.load %arg0[%c0_6, %c0_7] : memref<128x128xbf16, #tpu.memory_space<vmem>>, vector<128x128xbf16>
    %7 = arith.truncf %5 : vector<128x128xf32> to vector<128x128xbf16>
    %cst_8 = arith.constant dense<0.000000e+00> : vector<128x128xf32>
    %8 = tpu.matmul %6, %7, %cst_8 {dimension_numbers = #tpu.dot_dimension_numbers<[1], [0], [0], [1], [0, 0, 1, 1], [], []>} : vector<128x128xbf16>, vector<128x128xbf16>, vector<128x128xf32> -> vector<128x128xf32>
    %c0_9 = arith.constant 0 : index
    %c0_10 = arith.constant 0 : index
    %9 = vector.load %arg3[%c0_9, %c0_10] : memref<1x128xf32, #tpu.memory_space<vmem>>, vector<1x128xf32>
    %10 = vector.broadcast %9 : vector<1x128xf32> to vector<128x128xf32>
    %11 = arith.addf %8, %10 : vector<128x128xf32>
    %cst_11 = arith.constant 0.000000e+00 : f32
    %12 = vector.broadcast %cst_11 : f32 to vector<128x128xf32>
    %13 = arith.maximumf %11, %12 : vector<128x128xf32>
    %14 = arith.truncf %13 : vector<128x128xf32> to vector<128x128xbf16>
    %c0_12 = arith.constant 0 : index
    %c0_13 = arith.constant 0 : index
    %15 = vector.load %arg4[%c0_12, %c0_13] : memref<128x128xbf16, #tpu.memory_space<vmem>>, vector<128x128xbf16>
    %cst_14 = arith.constant dense<0.000000e+00> : vector<128x128xf32>
    %16 = tpu.matmul %14, %15, %cst_14 {dimension_numbers = #tpu.dot_dimension_numbers<[1], [0], [0], [1], [0, 0, 1, 1], [], []>} : vector<128x128xbf16>, vector<128x128xbf16>, vector<128x128xf32> -> vector<128x128xf32>
    %c0_15 = arith.constant 0 : index
    %c0_16 = arith.constant 0 : index
    %17 = vector.load %arg5[%c0_15, %c0_16] : memref<1x128xf32, #tpu.memory_space<vmem>>, vector<1x128xf32>
    %18 = vector.broadcast %17 : vector<1x128xf32> to vector<128x128xf32>
    %19 = arith.addf %16, %18 : vector<128x128xf32>
    %cst_17 = arith.constant dense<0xFF800000> : vector<128xf32>
    %20 = vector.multi_reduction <maximumf>, %19, %cst_17 [1] : vector<128x128xf32> to vector<128xf32>
    %21 = vector.shape_cast %20 : vector<128xf32> to vector<128x1xf32>
    %22 = vector.broadcast %21 : vector<128x1xf32> to vector<128x128xf32>
    %23 = arith.subf %19, %22 : vector<128x128xf32>
    %24 = math.exp %23 : vector<128x128xf32>
    %cst_18 = arith.constant dense<0.000000e+00> : vector<128xf32>
    %25 = vector.multi_reduction <add>, %24, %cst_18 [1] : vector<128x128xf32> to vector<128xf32>
    %26 = vector.shape_cast %25 : vector<128xf32> to vector<128x1xf32>
    %27 = math.log %26 : vector<128x1xf32>
    %28 = vector.broadcast %27 : vector<128x1xf32> to vector<128x128xf32>
    %29 = arith.subf %23, %28 : vector<128x128xf32>
    %c0_19 = arith.constant 0 : index
    %c0_20 = arith.constant 0 : index
    %30 = vector.load %arg6[%c0_19, %c0_20] : memref<128x128xf32, #tpu.memory_space<vmem>>, vector<128x128xf32>
    tpu.vector_store %arg6[%c0_19, %c0_20], %29 {strides = array<i32>} : memref<128x128xf32, #tpu.memory_space<vmem>>, vector<128x128xf32>,
    return
  }
}

</mosaic_0001>

<llo_original>
// kernel: tpu_custom_call.1
$region0: #{tpu_custom_call.1}
  #allocation0 [shape = 'u32[]', space=smem, size = 0x4, offset = 0x4, fixed_abs, tag = 'smem constant byte address 0x4 - core index']
  #allocation1 [shape = 'u32[144,128]{1,0:T(1,128)}', space=vmem, size = 0x12000, scoped, tag = 'internal scratch']
  %s0 = inlined_call_operand.hbm [shape: bf16[128,128], index: 0, kind: input, shape index: {}]
  %s1 = inlined_call_operand.hbm [shape: bf16[128,128], index: 1, kind: input, shape index: {}]
  %s2 = inlined_call_operand.hbm [shape: bf16[128,128], index: 2, kind: input, shape index: {}]
  %s3 = inlined_call_operand.vmem [shape: f32[1,128], index: 3, kind: input, shape index: {}]
  %s4 = inlined_call_operand.hbm [shape: bf16[128,128], index: 4, kind: input, shape index: {}]
  %s5 = inlined_call_operand.vmem [shape: f32[1,128], index: 5, kind: input, shape index: {}]
  %s6 = inlined_call_operand.hbm [shape: f32[128,128], index: 6, kind: output, shape index: {}]
  %s7 = sld [smem:[#allocation0]]
  $region50: #{tpu_custom_call.1} parent=0
    _
  %s9 = ssub.s32 1, %s7
  %s10 = scalar_select 0, %s9, %s7
  $region1: #{tpu_custom_call.1} parent=0
    #allocation2 [shape = 'u8[32768]{0}', space=vmem, size = 0x8000, scoped, tag = 'input window, operand 0, single buffered']
    #allocation3 [shape = 's32[1]{0}', space=sflag, size = 0x4, scoped, tag = 'scoped memory for tpu_custom_call.1']
    #allocation4 [shape = 's32[1]{0}', space=sflag, size = 0x4, scoped, tag = 'scoped memory for tpu_custom_call.1']
    #allocation5 [shape = 'u8[32768]{0}', space=vmem, size = 0x8000, scoped, tag = 'input window, operand 1, single buffered']
    #allocation6 [shape = 's32[1]{0}', space=sflag, size = 0x4, scoped, tag = 'scoped memory for tpu_custom_call.1']
    #allocation7 [shape = 'u8[32768]{0}', space=vmem, size = 0x8000, scoped, tag = 'input window, operand 2, single buffered']
    #allocation8 [shape = 'u8[32768]{0}', space=vmem, size = 0x8000, scoped, tag = 'input window, operand 4, single buffered']
    #allocation9 [shape = 's32[1]{0}', space=sflag, size = 0x4, scoped, tag = 'scoped memory for tpu_custom_call.1']
    #allocation10 [shape = 'u8[65536]{0}', space=vmem, size = 0x10000, scoped, tag = 'output window, operand 0, single buffered']
    %11 = vsyncpa [#allocation3], 0
    %12 = vsyncpa [#allocation6], 0
    %13 = vsyncpa [#allocation9], 0
    %14 = vsyncpa [#allocation4], 0
    // Predicated region
    $region2: #{tpu_custom_call.1} parent=1 // pred_check
      _
    $region3: #{tpu_custom_call.1} parent=1 // pred_check_branch
      %16 = sbr.rel (0) target = $region5
    $region4: #{tpu_custom_call.1} parent=1 // pred_region
      %s18 = ssub.s32 1024, 1024
      %19 = vsyncadd [#allocation3], %s18
      %s20 = sshll.u32 [#allocation2], 4
      %s21 = int_to_ptr.vmem [resolvable:$true] %s20
      %26 = dma.hbm_to_vmem [thread:$0]  %s0, 1024, %s21, [#allocation3], 64, 64, 4
    $region5: #{tpu_custom_call.1} parent=1 // pred_fallthru
      _
    // Predicated region
    $region6: #{tpu_custom_call.1} parent=1 // pred_check
      _
    $region7: #{tpu_custom_call.1} parent=1 // pred_check_branch
      %28 = sbr.rel (0) target = $region9
    $region8: #{tpu_custom_call.1} parent=1 // pred_region
      %s30 = ssub.s32 1024, 1024
      %31 = vsyncadd [#allocation6], %s30
      %s32 = sshll.u32 [#allocation5], 4
      %s33 = int_to_ptr.vmem [resolvable:$true] %s32
      %38 = dma.hbm_to_vmem [thread:$0]  %s1, 1024, %s33, [#allocation6], 64, 64, 4
    $region9: #{tpu_custom_call.1} parent=1 // pred_fallthru
      _
    // Predicated region
    $region10: #{tpu_custom_call.1} parent=1 // pred_check
      _
    $region11: #{tpu_custom_call.1} parent=1 // pred_check_branch
      %40 = sbr.rel (0) target = $region13
    $region12: #{tpu_custom_call.1} parent=1 // pred_region
      %s42 = ssub.s32 1024, 1024
      %43 = vsyncadd [#allocation6], %s42
      %s44 = sshll.u32 [#allocation7], 4
      %s45 = int_to_ptr.vmem [resolvable:$true] %s44
      %50 = dma.hbm_to_vmem [thread:$0]  %s2, 1024, %s45, [#allocation6], 64, 64, 4
    $region13: #{tpu_custom_call.1} parent=1 // pred_fallthru
      _
    // Predicated region
    $region14: #{tpu_custom_call.1} parent=1 // pred_check
      _
    $region15: #{tpu_custom_call.1} parent=1 // pred_check_branch
      %52 = sbr.rel (0) target = $region17
    $region16: #{tpu_custom_call.1} parent=1 // pred_region
      _
    $region17: #{tpu_custom_call.1} parent=1 // pred_fallthru
      _
    // Predicated region
    $region18: #{tpu_custom_call.1} parent=1 // pred_check
      _
    $region19: #{tpu_custom_call.1} parent=1 // pred_check_branch
      %54 = sbr.rel (0) target = $region21
    $region20: #{tpu_custom_call.1} parent=1 // pred_region
      %s56 = ssub.s32 1024, 1024
      %57 = vsyncadd [#allocation9], %s56
      %s58 = sshll.u32 [#allocation8], 4
      %s59 = int_to_ptr.vmem [resolvable:$true] %s58
      %64 = dma.hbm_to_vmem [thread:$0]  %s4, 1024, %s59, [#allocation9], 64, 64, 4
    $region21: #{tpu_custom_call.1} parent=1 // pred_fallthru
      _
    // Predicated region
    $region22: #{tpu_custom_call.1} parent=1 // pred_check
      _
    $region23: #{tpu_custom_call.1} parent=1 // pred_check_branch
      %66 = sbr.rel (0) target = $region25
    $region24: #{tpu_custom_call.1} parent=1 // pred_region
      _
    $region25: #{tpu_custom_call.1} parent=1 // pred_fallthru
      _
    // Predicated region
    $region26: #{tpu_custom_call.1} parent=1 // pred_check
      _
    $region27: #{tpu_custom_call.1} parent=1 // pred_check_branch
      %68 = sbr.rel (0) target = $region29
    $region28: #{tpu_custom_call.1} parent=1 // pred_region
      %69 = dma.done [#allocation3], 1024
    $region29: #{tpu_custom_call.1} parent=1 // pred_fallthru
      _
    // Predicated region
    $region30: #{tpu_custom_call.1} parent=1 // pred_check
      _
    $region31: #{tpu_custom_call.1} parent=1 // pred_check_branch
      %71 = sbr.rel (0) target = $region33
    $region32: #{tpu_custom_call.1} parent=1 // pred_region
      %72 = dma.done [#allocation6], 1024
    $region33: #{tpu_custom_call.1} parent=1 // pred_fallthru
      _
    // Predicated region
    $region34: #{tpu_custom_call.1} parent=1 // pred_check
      _
    $region35: #{tpu_custom_call.1} parent=1 // pred_check_branch
      %74 = sbr.rel (0) target = $region37
    $region36: #{tpu_custom_call.1} parent=1 // pred_region
      %75 = dma.done [#allocation6], 1024
    $region37: #{tpu_custom_call.1} parent=1 // pred_fallthru
      _
    // Predicated region
    $region38: #{tpu_custom_call.1} parent=1 // pred_check
      _
    $region39: #{tpu_custom_call.1} parent=1 // pred_check_branch
      %77 = sbr.rel (0) target = $region41
    $region40: #{tpu_custom_call.1} parent=1 // pred_region
      %78 = dma.done [#allocation9], 1024
    $region41: #{tpu_custom_call.1} parent=1 // pred_fallthru
      _
    %v80 = vld [vmem:[#allocation5] sm:$0xf]
    %v81 = vld [vmem:[#allocation5 + $0x4] sm:$0xf]
    %v82 = vld [vmem:[#allocation5 + $0x8] sm:$0xf]
    %v83 = vld [vmem:[#allocation5 + $0xc] sm:$0xf]
    %v84 = vld [vmem:[#allocation5 + $0x10] sm:$0xf]
    %v85 = vld [vmem:[#allocation5 + $0x14] sm:$0xf]
    %v86 = vld [vmem:[#allocation5 + $0x18] sm:$0xf]
    %v87 = vld [vmem:[#allocation5 + $0x1c] sm:$0xf]
    %v88 = vld [vmem:[#allocation5 + $0x20] sm:$0xf]
    %v89 = vld [vmem:[#allocation5 + $0x24] sm:$0xf]
    %v90 = vld [vmem:[#allocation5 + $0x28] sm:$0xf]
    %v91 = vld [vmem:[#allocation5 + $0x2c] sm:$0xf]
    %v92 = vld [vmem:[#allocation5 + $0x30] sm:$0xf]
    %v93 = vld [vmem:[#allocation5 + $0x34] sm:$0xf]
    %v94 = vld [vmem:[#allocation5 + $0x38] sm:$0xf]
    %v95 = vld [vmem:[#allocation5 + $0x3c] sm:$0xf]
    %v96 = vld [vmem:[#allocation7] sm:$0xf]
    %v97 = vld [vmem:[#allocation7 + $0x4] sm:$0xf]
    %v98 = vld [vmem:[#allocation7 + $0x8] sm:$0xf]
    %v99 = vld [vmem:[#allocation7 + $0xc] sm:$0xf]
    %v100 = vld [vmem:[#allocation7 + $0x10] sm:$0xf]
    %v101 = vld [vmem:[#allocation7 + $0x14] sm:$0xf]
    %v102 = vld [vmem:[#allocation7 + $0x18] sm:$0xf]
    %v103 = vld [vmem:[#allocation7 + $0x1c] sm:$0xf]
    %v104 = vld [vmem:[#allocation7 + $0x20] sm:$0xf]
    %v105 = vld [vmem:[#allocation7 + $0x24] sm:$0xf]
    %v106 = vld [vmem:[#allocation7 + $0x28] sm:$0xf]
    %v107 = vld [vmem:[#allocation7 + $0x2c] sm:$0xf]
    %v108 = vld [vmem:[#allocation7 + $0x30] sm:$0xf]
    %v109 = vld [vmem:[#allocation7 + $0x34] sm:$0xf]
    %v110 = vld [vmem:[#allocation7 + $0x38] sm:$0xf]
    %v111 = vld [vmem:[#allocation7 + $0x3c] sm:$0xf]
    %v128 = vunpack.c.l.b16 %v80
    %v129 = vunpack.c.l.b16 %v81
    %v130 = vunpack.c.l.b16 %v82
    %v131 = vunpack.c.l.b16 %v83
    %v132 = vunpack.c.l.b16 %v84
    %v133 = vunpack.c.l.b16 %v85
    %v134 = vunpack.c.l.b16 %v86
    %v135 = vunpack.c.l.b16 %v87
    %v136 = vunpack.c.l.b16 %v88
    %v137 = vunpack.c.l.b16 %v89
    %v138 = vunpack.c.l.b16 %v90
    %v139 = vunpack.c.l.b16 %v91
    %v140 = vunpack.c.l.b16 %v92
    %v141 = vunpack.c.l.b16 %v93
    %v142 = vunpack.c.l.b16 %v94
    %v143 = vunpack.c.l.b16 %v95
    %v144 = vpack.c.b16 %v129, %v128
    %v145 = vpack.c.b16 %v131, %v130
    %v146 = vpack.c.b16 %v133, %v132
    %v147 = vpack.c.b16 %v135, %v134
    %v148 = vpack.c.b16 %v137, %v136
    %v149 = vpack.c.b16 %v139, %v138
    %v150 = vpack.c.b16 %v141, %v140
    %v151 = vpack.c.b16 %v143, %v142
    %v176 = vunpack.c.l.b16 %v96
    %v177 = vunpack.c.l.b16 %v97
    %v178 = vunpack.c.l.b16 %v98
    %v179 = vunpack.c.l.b16 %v99
    %v180 = vunpack.c.l.b16 %v100
    %v181 = vunpack.c.l.b16 %v101
    %v182 = vunpack.c.l.b16 %v102
    %v183 = vunpack.c.l.b16 %v103
    %v184 = vunpack.c.l.b16 %v104
    %v185 = vunpack.c.l.b16 %v105
    %v186 = vunpack.c.l.b16 %v106
    %v187 = vunpack.c.l.b16 %v107
    %v188 = vunpack.c.l.b16 %v108
    %v189 = vunpack.c.l.b16 %v109
    %v190 = vunpack.c.l.b16 %v110
    %v191 = vunpack.c.l.b16 %v111
    %v192 = vpack.c.b16 %v177, %v176
    %v193 = vpack.c.b16 %v179, %v178
    %v194 = vpack.c.b16 %v181, %v180
    %v195 = vpack.c.b16 %v183, %v182
    %v196 = vpack.c.b16 %v185, %v184
    %v197 = vpack.c.b16 %v187, %v186
    %v198 = vpack.c.b16 %v189, %v188
    %v199 = vpack.c.b16 %v191, %v190
    %208 = vmatprep.subr.bf16.mxu0 0
    %209 = vmatpush1.bf16.msra.mxu0 %v192
    %210 = vmatprep.subr.bf16.mxu0 0
    %211 = vmatpush1.bf16.msra.mxu0 %v193
    %212 = vmatprep.subr.bf16.mxu0 0
    %213 = vmatpush1.bf16.msra.mxu0 %v194
    %214 = vmatprep.subr.bf16.mxu0 0
    %215 = vmatpush1.bf16.msra.mxu0 %v195
    %216 = vmatprep.subr.bf16.mxu0 0
    %217 = vmatpush1.bf16.msra.mxu0 %v196
    %218 = vmatprep.subr.bf16.mxu0 0
    %219 = vmatpush1.bf16.msra.mxu0 %v197
    %220 = vmatprep.subr.bf16.mxu0 0
    %221 = vmatpush1.bf16.msra.mxu0 %v198
    %222 = vmatprep.subr.bf16.mxu0 0
    %223 = vmatpush1.bf16.msra.mxu0 %v199
    %224 = vmatprep.subr.bf16.mxu0 0
    %225 = vmatpush1.bf16.msra.mxu0 0
    %226 = vmatprep.subr.bf16.mxu0 0
    %227 = vmatpush1.bf16.msra.mxu0 0
    %228 = vmatprep.subr.bf16.mxu0 0
    %229 = vmatpush1.bf16.msra.mxu0 0
    %230 = vmatprep.subr.bf16.mxu0 0
    %231 = vmatpush1.bf16.msra.mxu0 0
    %232 = vmatprep.subr.bf16.mxu0 0
    %233 = vmatpush1.bf16.msra.mxu0 0
    %234 = vmatprep.subr.bf16.mxu0 0
    %235 = vmatpush1.bf16.msra.mxu0 0
    %236 = vmatprep.subr.bf16.mxu0 0
    %237 = vmatpush1.bf16.msra.mxu0 0
    %238 = vmatprep.subr.bf16.mxu0 0
    %239 = vmatpush1.bf16.msra.mxu0 0
    %240 = vmatprep.mubr.bf16.mxu0 0
    %241 = vmatmul.mubr.bf16.gmra.mrb[0].mxu0 %v144
    %v242 = vpop.f32.mrb[0].mxu0
    %v243 = vadd.f32 0.0, %v242
    %v244 = vpop.f32.mrb[0].mxu0
    %v245 = vpop.f32.mrb[0].mxu0
    %v246 = vadd.f32 0.0, %v245
    %v247 = vpop.f32.mrb[0].mxu0
    %248 = vmatprep.mubr.bf16.mxu0 0
    %249 = vmatmul.mubr.bf16.gmra.mrb[0].mxu0 %v145
    %v250 = vpop.f32.mrb[0].mxu0
    %v251 = vadd.f32 0.0, %v250
    %v252 = vpop.f32.mrb[0].mxu0
    %v253 = vpop.f32.mrb[0].mxu0
    %v254 = vadd.f32 0.0, %v253
    %v255 = vpop.f32.mrb[0].mxu0
    %256 = vmatprep.mubr.bf16.mxu0 0
    %257 = vmatmul.mubr.bf16.gmra.mrb[0].mxu0 %v146
    %v258 = vpop.f32.mrb[0].mxu0
    %v259 = vadd.f32 0.0, %v258
    %v260 = vpop.f32.mrb[0].mxu0
    %v261 = vpop.f32.mrb[0].mxu0
    %v262 = vadd.f32 0.0, %v261
    %v263 = vpop.f32.mrb[0].mxu0
    %264 = vmatprep.mubr.bf16.mxu0 0
    %265 = vmatmul.mubr.bf16.gmra.mrb[0].mxu0 %v147
    %v266 = vpop.f32.mrb[0].mxu0
    %v267 = vadd.f32 0.0, %v266
    %v268 = vpop.f32.mrb[0].mxu0
    %v269 = vpop.f32.mrb[0].mxu0
    %v270 = vadd.f32 0.0, %v269
    %v271 = vpop.f32.mrb[0].mxu0
    %272 = vmatprep.mubr.bf16.mxu0 0
    %273 = vmatmul.mubr.bf16.gmra.mrb[0].mxu0 %v148
    %v274 = vpop.f32.mrb[0].mxu0
    %v275 = vadd.f32 0.0, %v274
    %v276 = vpop.f32.mrb[0].mxu0
    %v277 = vpop.f32.mrb[0].mxu0
    %v278 = vadd.f32 0.0, %v277
    %v279 = vpop.f32.mrb[0].mxu0
    %280 = vmatprep.mubr.bf16.mxu0 0
    %281 = vmatmul.mubr.bf16.gmra.mrb[0].mxu0 %v149
    %v282 = vpop.f32.mrb[0].mxu0
    %v283 = vadd.f32 0.0, %v282
    %v284 = vpop.f32.mrb[0].mxu0
    %v285 = vpop.f32.mrb[0].mxu0
    %v286 = vadd.f32 0.0, %v285
    %v287 = vpop.f32.mrb[0].mxu0
    %288 = vmatprep.mubr.bf16.mxu0 0
    %289 = vmatmul.mubr.bf16.gmra.mrb[0].mxu0 %v150
    %v290 = vpop.f32.mrb[0].mxu0
    %v291 = vadd.f32 0.0, %v290
    %v292 = vpop.f32.mrb[0].mxu0
    %v293 = vpop.f32.mrb[0].mxu0
    %v294 = vadd.f32 0.0, %v293
    %v295 = vpop.f32.mrb[0].mxu0
    %296 = vmatprep.mubr.bf16.mxu0 0
    %297 = vmatmul.mubr.bf16.gmra.mrb[0].mxu0 %v151
    %v298 = vpop.f32.mrb[0].mxu0
    %v299 = vadd.f32 0.0, %v298
    %v300 = vpop.f32.mrb[0].mxu0
    %v301 = vpop.f32.mrb[0].mxu0
    %v302 = vadd.f32 0.0, %v301
    %v303 = vpop.f32.mrb[0].mxu0
    %304 = vdwg.mxu0
    %v305 = vld [vmem:[#allocation2] sm:$0xf]
    %v306 = vld [vmem:[#allocation2 + $0x4] sm:$0xf]
    %v307 = vld [vmem:[#allocation2 + $0x8] sm:$0xf]
    %v308 = vld [vmem:[#allocation2 + $0xc] sm:$0xf]
    %v309 = vld [vmem:[#allocation2 + $0x10] sm:$0xf]
    %v310 = vld [vmem:[#allocation2 + $0x14] sm:$0xf]
    %v311 = vld [vmem:[#allocation2 + $0x18] sm:$0xf]
    %v312 = vld [vmem:[#allocation2 + $0x1c] sm:$0xf]
    %v313 = vld [vmem:[#allocation2 + $0x20] sm:$0xf]
    %v314 = vld [vmem:[#allocation2 + $0x24] sm:$0xf]
    %v315 = vld [vmem:[#allocation2 + $0x28] sm:$0xf]
    %v316 = vld [vmem:[#allocation2 + $0x2c] sm:$0xf]
    %v317 = vld [vmem:[#allocation2 + $0x30] sm:$0xf]
    %v318 = vld [vmem:[#allocation2 + $0x34] sm:$0xf]
    %v319 = vld [vmem:[#allocation2 + $0x38] sm:$0xf]
    %v320 = vld [vmem:[#allocation2 + $0x3c] sm:$0xf]
    %v321 = vpack.c.bf16 %v246, %v243
    %v322 = vpack.c.bf16 %v254, %v251
    %v323 = vpack.c.bf16 %v262, %v259
    %v324 = vpack.c.bf16 %v270, %v267
    %v325 = vpack.c.bf16 %v278, %v275
    %v326 = vpack.c.bf16 %v286, %v283
    %v327 = vpack.c.bf16 %v294, %v291
    %v328 = vpack.c.bf16 %v302, %v299
    %v345 = vunpack.c.l.b16 %v305
    %v346 = vunpack.c.l.b16 %v306
    %v347 = vunpack.c.l.b16 %v307
    %v348 = vunpack.c.l.b16 %v308
    %v349 = vunpack.c.l.b16 %v309
    %v350 = vunpack.c.l.b16 %v310
    %v351 = vunpack.c.l.b16 %v311
    %v352 = vunpack.c.l.b16 %v312
    %v353 = vunpack.c.l.b16 %v313
    %v354 = vunpack.c.l.b16 %v314
    %v355 = vunpack.c.l.b16 %v315
    %v356 = vunpack.c.l.b16 %v316
    %v357 = vunpack.c.l.b16 %v317
    %v358 = vunpack.c.l.b16 %v318
    %v359 = vunpack.c.l.b16 %v319
    %v360 = vunpack.c.l.b16 %v320
    %v361 = vpack.c.b16 %v346, %v345
    %v362 = vpack.c.b16 %v348, %v347
    %v363 = vpack.c.b16 %v350, %v349
    %v364 = vpack.c.b16 %v352, %v351
    %v365 = vpack.c.b16 %v354, %v353
    %v366 = vpack.c.b16 %v356, %v355
    %v367 = vpack.c.b16 %v358, %v357
    %v368 = vpack.c.b16 %v360, %v359
    %377 = vmatprep.subr.bf16.mxu0 0
    %378 = vmatpush1.bf16.msra.mxu0 %v321
    %379 = vmatprep.subr.bf16.mxu0 0
    %380 = vmatpush1.bf16.msra.mxu0 %v322
    %381 = vmatprep.subr.bf16.mxu0 0
    %382 = vmatpush1.bf16.msra.mxu0 %v323
    %383 = vmatprep.subr.bf16.mxu0 0
    %384 = vmatpush1.bf16.msra.mxu0 %v324
    %385 = vmatprep.subr.bf16.mxu0 0
    %386 = vmatpush1.bf16.msra.mxu0 %v325
    %387 = vmatprep.subr.bf16.mxu0 0
    %388 = vmatpush1.bf16.msra.mxu0 %v326
    %389 = vmatprep.subr.bf16.mxu0 0
    %390 = vmatpush1.bf16.msra.mxu0 %v327
    %391 = vmatprep.subr.bf16.mxu0 0
    %392 = vmatpush1.bf16.msra.mxu0 %v328
    %393 = vmatprep.subr.bf16.mxu0 0
    %394 = vmatpush1.bf16.msra.mxu0 0
    %395 = vmatprep.subr.bf16.mxu0 0
    %396 = vmatpush1.bf16.msra.mxu0 0
    %397 = vmatprep.subr.bf16.mxu0 0
    %398 = vmatpush1.bf16.msra.mxu0 0
    %399 = vmatprep.subr.bf16.mxu0 0
    %400 = vmatpush1.bf16.msra.mxu0 0
    %401 = vmatprep.subr.bf16.mxu0 0
    %402 = vmatpush1.bf16.msra.mxu0 0
    %403 = vmatprep.subr.bf16.mxu0 0
    %404 = vmatpush1.bf16.msra.mxu0 0
    %405 = vmatprep.subr.bf16.mxu0 0
    %406 = vmatpush1.bf16.msra.mxu0 0
    %407 = vmatprep.subr.bf16.mxu0 0
    %408 = vmatpush1.bf16.msra.mxu0 0
    %409 = vmatprep.mubr.bf16.mxu0 0
    %410 = vmatmul.mubr.bf16.gmra.mrb[0].mxu0 %v361
    %v411 = vpop.f32.mrb[0].mxu0
    %v412 = vadd.f32 0.0, %v411
    %v413 = vpop.f32.mrb[0].mxu0
    %v414 = vpop.f32.mrb[0].mxu0
    %v415 = vadd.f32 0.0, %v414
    %v416 = vpop.f32.mrb[0].mxu0
    %417 = vmatprep.mubr.bf16.mxu0 0
    %418 = vmatmul.mubr.bf16.gmra.mrb[0].mxu0 %v362
    %v419 = vpop.f32.mrb[0].mxu0
    %v420 = vadd.f32 0.0, %v419
    %v421 = vpop.f32.mrb[0].mxu0
    %v422 = vpop.f32.mrb[0].mxu0
    %v423 = vadd.f32 0.0, %v422
    %v424 = vpop.f32.mrb[0].mxu0
    %425 = vmatprep.mubr.bf16.mxu0 0
    %426 = vmatmul.mubr.bf16.gmra.mrb[0].mxu0 %v363
    %v427 = vpop.f32.mrb[0].mxu0
    %v428 = vadd.f32 0.0, %v427
    %v429 = vpop.f32.mrb[0].mxu0
    %v430 = vpop.f32.mrb[0].mxu0
    %v431 = vadd.f32 0.0, %v430
    %v432 = vpop.f32.mrb[0].mxu0
    %433 = vmatprep.mubr.bf16.mxu0 0
    %434 = vmatmul.mubr.bf16.gmra.mrb[0].mxu0 %v364
    %v435 = vpop.f32.mrb[0].mxu0
    %v436 = vadd.f32 0.0, %v435
    %v437 = vpop.f32.mrb[0].mxu0
    %v438 = vpop.f32.mrb[0].mxu0
    %v439 = vadd.f32 0.0, %v438
    %v440 = vpop.f32.mrb[0].mxu0
    %441 = vmatprep.mubr.bf16.mxu0 0
    %442 = vmatmul.mubr.bf16.gmra.mrb[0].mxu0 %v365
    %v443 = vpop.f32.mrb[0].mxu0
    %v444 = vadd.f32 0.0, %v443
    %v445 = vpop.f32.mrb[0].mxu0
    %v446 = vpop.f32.mrb[0].mxu0
    %v447 = vadd.f32 0.0, %v446
    %v448 = vpop.f32.mrb[0].mxu0
    %449 = vmatprep.mubr.bf16.mxu0 0
    %450 = vmatmul.mubr.bf16.gmra.mrb[0].mxu0 %v366
    %v451 = vpop.f32.mrb[0].mxu0
    %v452 = vadd.f32 0.0, %v451
    %v453 = vpop.f32.mrb[0].mxu0
    %v454 = vpop.f32.mrb[0].mxu0
    %v455 = vadd.f32 0.0, %v454
    %v456 = vpop.f32.mrb[0].mxu0
    %457 = vmatprep.mubr.bf16.mxu0 0
    %458 = vmatmul.mubr.bf16.gmra.mrb[0].mxu0 %v367
    %v459 = vpop.f32.mrb[0].mxu0
    %v460 = vadd.f32 0.0, %v459
    %v461 = vpop.f32.mrb[0].mxu0
    %v462 = vpop.f32.mrb[0].mxu0
    %v463 = vadd.f32 0.0, %v462
    %v464 = vpop.f32.mrb[0].mxu0
    %465 = vmatprep.mubr.bf16.mxu0 0
    %466 = vmatmul.mubr.bf16.gmra.mrb[0].mxu0 %v368
    %v467 = vpop.f32.mrb[0].mxu0
    %v468 = vadd.f32 0.0, %v467
    %v469 = vpop.f32.mrb[0].mxu0
    %v470 = vpop.f32.mrb[0].mxu0
    %v471 = vadd.f32 0.0, %v470
    %v472 = vpop.f32.mrb[0].mxu0
    %473 = vdwg.mxu0
    %v474 = vpack.c.bf16 %v415, %v412
    %v475 = vpack.c.bf16 %v423, %v420
    %v476 = vpack.c.bf16 %v431, %v428
    %v477 = vpack.c.bf16 %v439, %v436
    %v478 = vpack.c.bf16 %v447, %v444
    %v479 = vpack.c.bf16 %v455, %v452
    %v480 = vpack.c.bf16 %v463, %v460
    %v481 = vpack.c.bf16 %v471, %v468
    %v482 = vld [vmem:[%s3] sm:$0x1]
    %v484 = vlaneseq
    %v485 = vshrl.u32 %v484, 7
    %v486 = vsub.s32 0, %v485
    %v487 = vrot.slane %v482, %v486
    %489 = vmatprep.subr.bf16.mxu0 0
    %490 = vmatpush1.bf16.msra.mxu0 %v474
    %491 = vmatprep.subr.bf16.mxu0 0
    %492 = vmatpush1.bf16.msra.mxu0 %v475
    %493 = vmatprep.subr.bf16.mxu0 0
    %494 = vmatpush1.bf16.msra.mxu0 %v476
    %495 = vmatprep.subr.bf16.mxu0 0
    %496 = vmatpush1.bf16.msra.mxu0 %v477
    %497 = vmatprep.subr.bf16.mxu0 0
    %498 = vmatpush1.bf16.msra.mxu0 %v478
    %499 = vmatprep.subr.bf16.mxu0 0
    %500 = vmatpush1.bf16.msra.mxu0 %v479
    %501 = vmatprep.subr.bf16.mxu0 0
    %502 = vmatpush1.bf16.msra.mxu0 %v480
    %503 = vmatprep.subr.bf16.mxu0 0
    %504 = vmatpush1.bf16.msra.mxu0 %v481
    %505 = vmatprep.subr.bf16.mxu0 0
    %506 = vmatpush1.bf16.msra.mxu0 0
    %507 = vmatprep.subr.bf16.mxu0 0
    %508 = vmatpush1.bf16.msra.mxu0 0
    %509 = vmatprep.subr.bf16.mxu0 0
    %510 = vmatpush1.bf16.msra.mxu0 0
    %511 = vmatprep.subr.bf16.mxu0 0
    %512 = vmatpush1.bf16.msra.mxu0 0
    %513 = vmatprep.subr.bf16.mxu0 0
    %514 = vmatpush1.bf16.msra.mxu0 0
    %515 = vmatprep.subr.bf16.mxu0 0
    %516 = vmatpush1.bf16.msra.mxu0 0
    %517 = vmatprep.subr.bf16.mxu0 0
    %518 = vmatpush1.bf16.msra.mxu0 0
    %519 = vmatprep.subr.bf16.mxu0 0
    %520 = vmatpush1.bf16.msra.mxu0 0
    %521 = vmatprep.mubr.bf16.mxu0 0
    %522 = vmatmul.mubr.bf16.gmra.mrb[0].mxu0 %v361
    %v523 = vpop.f32.mrb[0].mxu0
    %v524 = vadd.f32 %v487, %v523
    %v525 = vpop.f32.mrb[0].mxu0
    %v526 = vpop.f32.mrb[0].mxu0
    %v527 = vadd.f32 %v487, %v526
    %v528 = vpop.f32.mrb[0].mxu0
    %529 = vmatprep.mubr.bf16.mxu0 0
    %530 = vmatmul.mubr.bf16.gmra.mrb[0].mxu0 %v362
    %v531 = vpop.f32.mrb[0].mxu0
    %v532 = vadd.f32 %v487, %v531
    %v533 = vpop.f32.mrb[0].mxu0
    %v534 = vpop.f32.mrb[0].mxu0
    %v535 = vadd.f32 %v487, %v534
    %v536 = vpop.f32.mrb[0].mxu0
    %537 = vmatprep.mubr.bf16.mxu0 0
    %538 = vmatmul.mubr.bf16.gmra.mrb[0].mxu0 %v363
    %v539 = vpop.f32.mrb[0].mxu0
    %v540 = vadd.f32 %v487, %v539
    %v541 = vpop.f32.mrb[0].mxu0
    %v542 = vpop.f32.mrb[0].mxu0
    %v543 = vadd.f32 %v487, %v542
    %v544 = vpop.f32.mrb[0].mxu0
    %545 = vmatprep.mubr.bf16.mxu0 0
    %546 = vmatmul.mubr.bf16.gmra.mrb[0].mxu0 %v364
    %v547 = vpop.f32.mrb[0].mxu0
    %v548 = vadd.f32 %v487, %v547
    %v549 = vpop.f32.mrb[0].mxu0
    %v550 = vpop.f32.mrb[0].mxu0
    %v551 = vadd.f32 %v487, %v550
    %v552 = vpop.f32.mrb[0].mxu0
    %553 = vmatprep.mubr.bf16.mxu0 0
    %554 = vmatmul.mubr.bf16.gmra.mrb[0].mxu0 %v365
    %v555 = vpop.f32.mrb[0].mxu0
    %v556 = vadd.f32 %v487, %v555
    %v557 = vpop.f32.mrb[0].mxu0
    %v558 = vpop.f32.mrb[0].mxu0
    %v559 = vadd.f32 %v487, %v558
    %v560 = vpop.f32.mrb[0].mxu0
    %561 = vmatprep.mubr.bf16.mxu0 0
    %562 = vmatmul.mubr.bf16.gmra.mrb[0].mxu0 %v366
    %v563 = vpop.f32.mrb[0].mxu0
    %v564 = vadd.f32 %v487, %v563
    %v565 = vpop.f32.mrb[0].mxu0
    %v566 = vpop.f32.mrb[0].mxu0
    %v567 = vadd.f32 %v487, %v566
    %v568 = vpop.f32.mrb[0].mxu0
    %569 = vmatprep.mubr.bf16.mxu0 0
    %570 = vmatmul.mubr.bf16.gmra.mrb[0].mxu0 %v367
    %v571 = vpop.f32.mrb[0].mxu0
    %v572 = vadd.f32 %v487, %v571
    %v573 = vpop.f32.mrb[0].mxu0
    %v574 = vpop.f32.mrb[0].mxu0
    %v575 = vadd.f32 %v487, %v574
    %v576 = vpop.f32.mrb[0].mxu0
    %577 = vmatprep.mubr.bf16.mxu0 0
    %578 = vmatmul.mubr.bf16.gmra.mrb[0].mxu0 %v368
    %v579 = vpop.f32.mrb[0].mxu0
    %v580 = vadd.f32 %v487, %v579
    %v581 = vpop.f32.mrb[0].mxu0
    %v582 = vpop.f32.mrb[0].mxu0
    %v583 = vadd.f32 %v487, %v582
    %v584 = vpop.f32.mrb[0].mxu0
    %585 = vdwg.mxu0
    %v586 = vmax.f32 %v524, 0.0
    %v587 = vmax.f32 %v527, 0.0
    %v588 = vmax.f32 %v532, 0.0
    %v589 = vmax.f32 %v535, 0.0
    %v590 = vmax.f32 %v540, 0.0
    %v591 = vmax.f32 %v543, 0.0
    %v592 = vmax.f32 %v548, 0.0
    %v593 = vmax.f32 %v551, 0.0
    %v594 = vmax.f32 %v556, 0.0
    %v595 = vmax.f32 %v559, 0.0
    %v596 = vmax.f32 %v564, 0.0
    %v597 = vmax.f32 %v567, 0.0
    %v598 = vmax.f32 %v572, 0.0
    %v599 = vmax.f32 %v575, 0.0
    %v600 = vmax.f32 %v580, 0.0
    %v601 = vmax.f32 %v583, 0.0
    %v602 = vpack.c.bf16 %v587, %v586
    %v603 = vpack.c.bf16 %v589, %v588
    %v604 = vpack.c.bf16 %v591, %v590
    %v605 = vpack.c.bf16 %v593, %v592
    %v606 = vpack.c.bf16 %v595, %v594
    %v607 = vpack.c.bf16 %v597, %v596
    %v608 = vpack.c.bf16 %v599, %v598
    %v609 = vpack.c.bf16 %v601, %v600
    %v610 = vld [vmem:[#allocation8] sm:$0xf]
    %v611 = vld [vmem:[#allocation8 + $0x4] sm:$0xf]
    %v612 = vld [vmem:[#allocation8 + $0x8] sm:$0xf]
    %v613 = vld [vmem:[#allocation8 + $0xc] sm:$0xf]
    %v614 = vld [vmem:[#allocation8 + $0x10] sm:$0xf]
    %v615 = vld [vmem:[#allocation8 + $0x14] sm:$0xf]
    %v616 = vld [vmem:[#allocation8 + $0x18] sm:$0xf]
    %v617 = vld [vmem:[#allocation8 + $0x1c] sm:$0xf]
    %v618 = vld [vmem:[#allocation8 + $0x20] sm:$0xf]
    %v619 = vld [vmem:[#allocation8 + $0x24] sm:$0xf]
    %v620 = vld [vmem:[#allocation8 + $0x28] sm:$0xf]
    %v621 = vld [vmem:[#allocation8 + $0x2c] sm:$0xf]
    %v622 = vld [vmem:[#allocation8 + $0x30] sm:$0xf]
    %v623 = vld [vmem:[#allocation8 + $0x34] sm:$0xf]
    %v624 = vld [vmem:[#allocation8 + $0x38] sm:$0xf]
    %v625 = vld [vmem:[#allocation8 + $0x3c] sm:$0xf]
    %v626 = vld [vmem:[%s5] sm:$0x1]
    %v628 = vlaneseq
    %v629 = vshrl.u32 %v628, 7
    %v630 = vsub.s32 0, %v629
    %v631 = vrot.slane %v626, %v630
    %v649 = vunpack.c.l.b16 %v610
    %v650 = vunpack.c.l.b16 %v611
    %v651 = vunpack.c.l.b16 %v612
    %v652 = vunpack.c.l.b16 %v613
    %v653 = vunpack.c.l.b16 %v614
    %v654 = vunpack.c.l.b16 %v615
    %v655 = vunpack.c.l.b16 %v616
    %v656 = vunpack.c.l.b16 %v617
    %v657 = vunpack.c.l.b16 %v618
    %v658 = vunpack.c.l.b16 %v619
    %v659 = vunpack.c.l.b16 %v620
    %v660 = vunpack.c.l.b16 %v621
    %v661 = vunpack.c.l.b16 %v622
    %v662 = vunpack.c.l.b16 %v623
    %v663 = vunpack.c.l.b16 %v624
    %v664 = vunpack.c.l.b16 %v625
    %v665 = vpack.c.b16 %v650, %v649
    %v666 = vpack.c.b16 %v652, %v651
    %v667 = vpack.c.b16 %v654, %v653
    %v668 = vpack.c.b16 %v656, %v655
    %v669 = vpack.c.b16 %v658, %v657
    %v670 = vpack.c.b16 %v660, %v659
    %v671 = vpack.c.b16 %v662, %v661
    %v672 = vpack.c.b16 %v664, %v663
    %681 = vmatprep.subr.bf16.mxu0 0
    %682 = vmatpush1.bf16.msra.mxu0 %v665
    %683 = vmatprep.subr.bf16.mxu0 0
    %684 = vmatpush1.bf16.msra.mxu0 %v666
    %685 = vmatprep.subr.bf16.mxu0 0
    %686 = vmatpush1.bf16.msra.mxu0 %v667
    %687 = vmatprep.subr.bf16.mxu0 0
    %688 = vmatpush1.bf16.msra.mxu0 %v668
    %689 = vmatprep.subr.bf16.mxu0 0
    %690 = vmatpush1.bf16.msra.mxu0 %v669
    %691 = vmatprep.subr.bf16.mxu0 0
    %692 = vmatpush1.bf16.msra.mxu0 %v670
    %693 = vmatprep.subr.bf16.mxu0 0
    %694 = vmatpush1.bf16.msra.mxu0 %v671
    %695 = vmatprep.subr.bf16.mxu0 0
    %696 = vmatpush1.bf16.msra.mxu0 %v672
    %697 = vmatprep.subr.bf16.mxu0 0
    %698 = vmatpush1.bf16.msra.mxu0 0
    %699 = vmatprep.subr.bf16.mxu0 0
    %700 = vmatpush1.bf16.msra.mxu0 0
    %701 = vmatprep.subr.bf16.mxu0 0
    %702 = vmatpush1.bf16.msra.mxu0 0
    %703 = vmatprep.subr.bf16.mxu0 0
    %704 = vmatpush1.bf16.msra.mxu0 0
    %705 = vmatprep.subr.bf16.mxu0 0
    %706 = vmatpush1.bf16.msra.mxu0 0
    %707 = vmatprep.subr.bf16.mxu0 0
    %708 = vmatpush1.bf16.msra.mxu0 0
    %709 = vmatprep.subr.bf16.mxu0 0
    %710 = vmatpush1.bf16.msra.mxu0 0
    %711 = vmatprep.subr.bf16.mxu0 0
    %712 = vmatpush1.bf16.msra.mxu0 0
    %713 = vmatprep.mubr.bf16.mxu0 0
    %714 = vmatmul.mubr.bf16.gmra.mrb[0].mxu0 %v602
    %v715 = vpop.f32.mrb[0].mxu0
    %v716 = vadd.f32 %v631, %v715
    %v717 = vpop.f32.mrb[0].mxu0
    %v718 = vpop.f32.mrb[0].mxu0
    %v719 = vadd.f32 %v631, %v718
    %v720 = vpop.f32.mrb[0].mxu0
    %721 = vmatprep.mubr.bf16.mxu0 0
    %722 = vmatmul.mubr.bf16.gmra.mrb[0].mxu0 %v603
    %v723 = vpop.f32.mrb[0].mxu0
    %v724 = vadd.f32 %v631, %v723
    %v725 = vpop.f32.mrb[0].mxu0
    %v726 = vpop.f32.mrb[0].mxu0
    %v727 = vadd.f32 %v631, %v726
    %v728 = vpop.f32.mrb[0].mxu0
    %729 = vmatprep.mubr.bf16.mxu0 0
    %730 = vmatmul.mubr.bf16.gmra.mrb[0].mxu0 %v604
    %v731 = vpop.f32.mrb[0].mxu0
    %v732 = vadd.f32 %v631, %v731
    %v733 = vpop.f32.mrb[0].mxu0
    %v734 = vpop.f32.mrb[0].mxu0
    %v735 = vadd.f32 %v631, %v734
    %v736 = vpop.f32.mrb[0].mxu0
    %737 = vmatprep.mubr.bf16.mxu0 0
    %738 = vmatmul.mubr.bf16.gmra.mrb[0].mxu0 %v605
    %v739 = vpop.f32.mrb[0].mxu0
    %v740 = vadd.f32 %v631, %v739
    %v741 = vpop.f32.mrb[0].mxu0
    %v742 = vpop.f32.mrb[0].mxu0
    %v743 = vadd.f32 %v631, %v742
    %v744 = vpop.f32.mrb[0].mxu0
    %745 = vmatprep.mubr.bf16.mxu0 0
    %746 = vmatmul.mubr.bf16.gmra.mrb[0].mxu0 %v606
    %v747 = vpop.f32.mrb[0].mxu0
    %v748 = vadd.f32 %v631, %v747
    %v749 = vpop.f32.mrb[0].mxu0
    %v750 = vpop.f32.mrb[0].mxu0
    %v751 = vadd.f32 %v631, %v750
    %v752 = vpop.f32.mrb[0].mxu0
    %753 = vmatprep.mubr.bf16.mxu0 0
    %754 = vmatmul.mubr.bf16.gmra.mrb[0].mxu0 %v607
    %v755 = vpop.f32.mrb[0].mxu0
    %v756 = vadd.f32 %v631, %v755
    %v757 = vpop.f32.mrb[0].mxu0
    %v758 = vpop.f32.mrb[0].mxu0
    %v759 = vadd.f32 %v631, %v758
    %v760 = vpop.f32.mrb[0].mxu0
    %761 = vmatprep.mubr.bf16.mxu0 0
    %762 = vmatmul.mubr.bf16.gmra.mrb[0].mxu0 %v608
    %v763 = vpop.f32.mrb[0].mxu0
    %v764 = vadd.f32 %v631, %v763
    %v765 = vpop.f32.mrb[0].mxu0
    %v766 = vpop.f32.mrb[0].mxu0
    %v767 = vadd.f32 %v631, %v766
    %v768 = vpop.f32.mrb[0].mxu0
    %769 = vmatprep.mubr.bf16.mxu0 0
    %770 = vmatmul.mubr.bf16.gmra.mrb[0].mxu0 %v609
    %v771 = vpop.f32.mrb[0].mxu0
    %v772 = vadd.f32 %v631, %v771
    %v773 = vpop.f32.mrb[0].mxu0
    %v774 = vpop.f32.mrb[0].mxu0
    %v775 = vadd.f32 %v631, %v774
    %v776 = vpop.f32.mrb[0].mxu0
    %777 = vdwg.mxu0
    %778 = vmax.xlane.f32.xlu0 %v716
    %v779 = vpop.xlane.xlu0 %778
    %780 = vmax.xlane.f32.xlu0 %v719
    %v781 = vpop.xlane.xlu0 %780
    %782 = vmax.xlane.f32.xlu0 %v724
    %v783 = vpop.xlane.xlu0 %782
    %784 = vmax.xlane.f32.xlu0 %v727
    %v785 = vpop.xlane.xlu0 %784
    %786 = vmax.xlane.f32.xlu0 %v732
    %v787 = vpop.xlane.xlu0 %786
    %788 = vmax.xlane.f32.xlu0 %v735
    %v789 = vpop.xlane.xlu0 %788
    %790 = vmax.xlane.f32.xlu0 %v740
    %v791 = vpop.xlane.xlu0 %790
    %792 = vmax.xlane.f32.xlu0 %v743
    %v793 = vpop.xlane.xlu0 %792
    %794 = vmax.xlane.f32.xlu0 %v748
    %v795 = vpop.xlane.xlu0 %794
    %796 = vmax.xlane.f32.xlu0 %v751
    %v797 = vpop.xlane.xlu0 %796
    %798 = vmax.xlane.f32.xlu0 %v756
    %v799 = vpop.xlane.xlu0 %798
    %800 = vmax.xlane.f32.xlu0 %v759
    %v801 = vpop.xlane.xlu0 %800
    %802 = vmax.xlane.f32.xlu0 %v764
    %v803 = vpop.xlane.xlu0 %802
    %804 = vmax.xlane.f32.xlu0 %v767
    %v805 = vpop.xlane.xlu0 %804
    %806 = vmax.xlane.f32.xlu0 %v772
    %v807 = vpop.xlane.xlu0 %806
    %808 = vmax.xlane.f32.xlu0 %v775
    %v809 = vpop.xlane.xlu0 %808
    %v810 = vsub.f32 %v716, %v779
    %v811 = vsub.f32 %v719, %v781
    %v812 = vsub.f32 %v724, %v783
    %v813 = vsub.f32 %v727, %v785
    %v814 = vsub.f32 %v732, %v787
    %v815 = vsub.f32 %v735, %v789
    %v816 = vsub.f32 %v740, %v791
    %v817 = vsub.f32 %v743, %v793
    %v818 = vsub.f32 %v748, %v795
    %v819 = vsub.f32 %v751, %v797
    %v820 = vsub.f32 %v756, %v799
    %v821 = vsub.f32 %v759, %v801
    %v822 = vsub.f32 %v764, %v803
    %v823 = vsub.f32 %v767, %v805
    %v824 = vsub.f32 %v772, %v807
    %v825 = vsub.f32 %v775, %v809
    %v826 = vmul.f32 %v810, 1.442695
    %v827 = vpow.pop %v826
    %v828 = vmul.f32 %v811, 1.442695
    %v829 = vpow.pop %v828
    %v830 = vmul.f32 %v812, 1.442695
    %v831 = vpow.pop %v830
    %v832 = vmul.f32 %v813, 1.442695
    %v833 = vpow.pop %v832
    %v834 = vmul.f32 %v814, 1.442695
    %v835 = vpow.pop %v834
    %v836 = vmul.f32 %v815, 1.442695
    %v837 = vpow.pop %v836
    %v838 = vmul.f32 %v816, 1.442695
    %v839 = vpow.pop %v838
    %v840 = vmul.f32 %v817, 1.442695
    %v841 = vpow.pop %v840
    %v842 = vmul.f32 %v818, 1.442695
    %v843 = vpow.pop %v842
    %v844 = vmul.f32 %v819, 1.442695
    %v845 = vpow.pop %v844
    %v846 = vmul.f32 %v820, 1.442695
    %v847 = vpow.pop %v846
    %v848 = vmul.f32 %v821, 1.442695
    %v849 = vpow.pop %v848
    %v850 = vmul.f32 %v822, 1.442695
    %v851 = vpow.pop %v850
    %v852 = vmul.f32 %v823, 1.442695
    %v853 = vpow.pop %v852
    %v854 = vmul.f32 %v824, 1.442695
    %v855 = vpow.pop %v854
    %v856 = vmul.f32 %v825, 1.442695
    %v857 = vpow.pop %v856
    %858 = vadd.xlane.f32.xlu0 %v827
    %v859 = vpop.xlane.xlu0 %858
    %860 = vadd.xlane.f32.xlu0 %v829
    %v861 = vpop.xlane.xlu0 %860
    %862 = vadd.xlane.f32.xlu0 %v831
    %v863 = vpop.xlane.xlu0 %862
    %864 = vadd.xlane.f32.xlu0 %v833
    %v865 = vpop.xlane.xlu0 %864
    %866 = vadd.xlane.f32.xlu0 %v835
    %v867 = vpop.xlane.xlu0 %866
    %868 = vadd.xlane.f32.xlu0 %v837
    %v869 = vpop.xlane.xlu0 %868
    %870 = vadd.xlane.f32.xlu0 %v839
    %v871 = vpop.xlane.xlu0 %870
    %872 = vadd.xlane.f32.xlu0 %v841
    %v873 = vpop.xlane.xlu0 %872
    %874 = vadd.xlane.f32.xlu0 %v843
    %v875 = vpop.xlane.xlu0 %874
    %876 = vadd.xlane.f32.xlu0 %v845
    %v877 = vpop.xlane.xlu0 %876
    %878 = vadd.xlane.f32.xlu0 %v847
    %v879 = vpop.xlane.xlu0 %878
    %880 = vadd.xlane.f32.xlu0 %v849
    %v881 = vpop.xlane.xlu0 %880
    %882 = vadd.xlane.f32.xlu0 %v851
    %v883 = vpop.xlane.xlu0 %882
    %884 = vadd.xlane.f32.xlu0 %v853
    %v885 = vpop.xlane.xlu0 %884
    %886 = vadd.xlane.f32.xlu0 %v855
    %v887 = vpop.xlane.xlu0 %886
    %888 = vadd.xlane.f32.xlu0 %v857
    %v889 = vpop.xlane.xlu0 %888
    %v890 = vlog2.pop %v859
    %v891 = vmul.f32 %v890, 0.6931472
    %v892 = vlog2.pop %v861
    %v893 = vmul.f32 %v892, 0.6931472
    %v894 = vlog2.pop %v863
    %v895 = vmul.f32 %v894, 0.6931472
    %v896 = vlog2.pop %v865
    %v897 = vmul.f32 %v896, 0.6931472
    %v898 = vlog2.pop %v867
    %v899 = vmul.f32 %v898, 0.6931472
    %v900 = vlog2.pop %v869
    %v901 = vmul.f32 %v900, 0.6931472
    %v902 = vlog2.pop %v871
    %v903 = vmul.f32 %v902, 0.6931472
    %v904 = vlog2.pop %v873
    %v905 = vmul.f32 %v904, 0.6931472
    %v906 = vlog2.pop %v875
    %v907 = vmul.f32 %v906, 0.6931472
    %v908 = vlog2.pop %v877
    %v909 = vmul.f32 %v908, 0.6931472
    %v910 = vlog2.pop %v879
    %v911 = vmul.f32 %v910, 0.6931472
    %v912 = vlog2.pop %v881
    %v913 = vmul.f32 %v912, 0.6931472
    %v914 = vlog2.pop %v883
    %v915 = vmul.f32 %v914, 0.6931472
    %v916 = vlog2.pop %v885
    %v917 = vmul.f32 %v916, 0.6931472
    %v918 = vlog2.pop %v887
    %v919 = vmul.f32 %v918, 0.6931472
    %v920 = vlog2.pop %v889
    %v921 = vmul.f32 %v920, 0.6931472
    %v922 = vsub.f32 %v810, %v891
    %v923 = vsub.f32 %v811, %v893
    %v924 = vsub.f32 %v812, %v895
    %v925 = vsub.f32 %v813, %v897
    %v926 = vsub.f32 %v814, %v899
    %v927 = vsub.f32 %v815, %v901
    %v928 = vsub.f32 %v816, %v903
    %v929 = vsub.f32 %v817, %v905
    %v930 = vsub.f32 %v818, %v907
    %v931 = vsub.f32 %v819, %v909
    %v932 = vsub.f32 %v820, %v911
    %v933 = vsub.f32 %v821, %v913
    %v934 = vsub.f32 %v822, %v915
    %v935 = vsub.f32 %v823, %v917
    %v936 = vsub.f32 %v824, %v919
    %v937 = vsub.f32 %v825, %v921
    %938 = vst [vmem:[#allocation10] sm:$0xff] %v922
    %939 = vst [vmem:[#allocation10 + $0x8] sm:$0xff] %v923
    %940 = vst [vmem:[#allocation10 + $0x10] sm:$0xff] %v924
    %941 = vst [vmem:[#allocation10 + $0x18] sm:$0xff] %v925
    %942 = vst [vmem:[#allocation10 + $0x20] sm:$0xff] %v926
    %943 = vst [vmem:[#allocation10 + $0x28] sm:$0xff] %v927
    %944 = vst [vmem:[#allocation10 + $0x30] sm:$0xff] %v928
    %945 = vst [vmem:[#allocation10 + $0x38] sm:$0xff] %v929
    %946 = vst [vmem:[#allocation10 + $0x40] sm:$0xff] %v930
    %947 = vst [vmem:[#allocation10 + $0x48] sm:$0xff] %v931
    %948 = vst [vmem:[#allocation10 + $0x50] sm:$0xff] %v932
    %949 = vst [vmem:[#allocation10 + $0x58] sm:$0xff] %v933
    %950 = vst [vmem:[#allocation10 + $0x60] sm:$0xff] %v934
    %951 = vst [vmem:[#allocation10 + $0x68] sm:$0xff] %v935
    %952 = vst [vmem:[#allocation10 + $0x70] sm:$0xff] %v936
    %953 = vst [vmem:[#allocation10 + $0x78] sm:$0xff] %v937
    // Predicated region
    $region42: #{tpu_custom_call.1} parent=1 // pred_check
      _
    $region43: #{tpu_custom_call.1} parent=1 // pred_check_branch
      %955 = sbr.rel (0) target = $region45
    $region44: #{tpu_custom_call.1} parent=1 // pred_region
      %s957 = ssub.s32 2048, 2048
      %958 = vsyncadd [#allocation4], %s957
      %s959 = sshll.u32 [#allocation10], 4
      %s960 = int_to_ptr.vmem [resolvable:$true] %s959
      %965 = dma.vmem_to_hbm [thread:$0]  %s960, 2048, %s6, [#allocation4], 128, 128, 8
    $region45: #{tpu_custom_call.1} parent=1 // pred_fallthru
      _
    // Predicated region
    $region46: #{tpu_custom_call.1} parent=1 // pred_check
      _
    $region47: #{tpu_custom_call.1} parent=1 // pred_check_branch
      %967 = sbr.rel (0) target = $region49
    $region48: #{tpu_custom_call.1} parent=1 // pred_region
      %968 = dma.done [#allocation4], 2048
    $region49: #{tpu_custom_call.1} parent=1 // pred_fallthru
      _
    %969 = vsyncpa [#allocation3], 1
    %970 = vsyncpa [#allocation6], 1
    %971 = vsyncpa [#allocation9], 1
    %972 = vsyncpa [#allocation4], 1

</llo_original>
